<compile_context>
chip_gen: v6e
topology: v6e:2x2x1
jax: 0.10.0
libtpu: 0.0.40
codegen_flags: <defaults>
</compile_context>

<pallas_src>
import functools

import jax
import jax.numpy as jnp
from jax.experimental import pallas as pl
from jax.experimental.pallas import tpu as pltpu


def _round_up(x, m):
    return ((x + m - 1) // m) * m


def _moving_avg_kernel(x_ref, o_ref, *, kernel_size, stride, pad, l_in, tl,
                       band_len, band_full, l8, mode):
    """One (output-time-tile, lane-chunk) step:  o = (CNT @ x_band) / k.

    x_ref : (l8, lane)  folded input, resident across the time grid axis.
    o_ref : (tl, lane)  output time-tile.

    CNT[i, j] = #{t in [0,k): clamp(g_i*stride - pad + t, 0, L-1) == j} folds
    the PyTorch replicate padding into integer tap counts on rows 0 / L-1.
    CNT is banded, so only the touched band of x is contracted.
    """
    ti = pl.program_id(1)

    # ---- band of input rows this time-tile touches (static when full) ----
    if band_full:
        start = 0
    else:
        start = jnp.maximum(ti * (tl * stride) - pad, 0)
        start = (start // 8) * 8                     # sublane-aligned
        start = jnp.minimum(start, l8 - band_len)    # keep slice in-bounds
        start = pl.multiple_of(start, 8)

    # ---- row-only quantities at (tl, 1): cheap VPU work ----
    g = ti * tl + jax.lax.broadcasted_iota(jnp.int32, (tl, 1), 0)   # out row
    lo = g * stride - pad                    # nominal window start (may be <0)
    hi = lo + (kernel_size - 1)              # nominal window end   (may be >=L)
    cnt_low = jnp.maximum(jnp.minimum(hi, 0) - lo + 1, 0)           # taps -> row 0
    cnt_high = jnp.maximum(hi - jnp.maximum(lo, l_in - 1) + 1, 0)   # taps -> row L-1

    # ---- banded integer tap-count matrix (tl, band_len) ----
    j = start + jax.lax.broadcasted_iota(jnp.int32, (tl, band_len), 1)  # in row
    interior = ((j >= lo) & (j <= hi)).astype(jnp.int32)
    cnt = jnp.where(j == 0, cnt_low,
                    jnp.where(j == l_in - 1, cnt_high, interior))

    if band_full:
        x_blk = x_ref[...]
    else:
        x_blk = x_ref[pl.ds(start, band_len), :]

    inv_k = 1.0 / kernel_size
    if mode == "bf16":
        # Native bf16 input: single MXU pass, exact integer weights, f32 acc.
        w = cnt.astype(jnp.float32).astype(jnp.bfloat16)
        acc = jnp.dot(w, x_blk, preferred_element_type=jnp.float32)
    elif mode == "split2":
        # f32 input: 2-way bf16 split of x -> 2 MXU passes (integer weights
        # are exact in bf16), instead of 6 passes of Precision.HIGHEST.
        w = cnt.astype(jnp.float32).astype(jnp.bfloat16)
        x_f32 = x_blk.astype(jnp.float32)
        x_hi = x_f32.astype(jnp.bfloat16)
        x_lo = (x_f32 - x_hi.astype(jnp.float32)).astype(jnp.bfloat16)
        acc = (jnp.dot(w, x_hi, preferred_element_type=jnp.float32)
               + jnp.dot(w, x_lo, preferred_element_type=jnp.float32))
    else:  # "exact": full f32 matmul, validation path.
        acc = jnp.dot(cnt.astype(jnp.float32), x_blk.astype(jnp.float32),
                      precision=jax.lax.Precision.HIGHEST,
                      preferred_element_type=jnp.float32)
    o_ref[...] = (acc * inv_k).astype(o_ref.dtype)


def moving_avg(x, kernel_size, stride, *, exact=False):
    """Pallas implementation of DLinear MovingAvg forward.

    x: (B, L, C).  Returns (B, L_out, C) with
    L_out = (L + 2*((kernel_size-1)//2) - kernel_size)//stride + 1.
    """
    B, L, C = x.shape
    pad = (kernel_size - 1) // 2
    l_out = (L + 2 * pad - kernel_size) // stride + 1
    if l_out < 1:
        raise ValueError("kernel_size/stride produce an empty output")
    if L == 1:
        # Degenerate series: every replicate-padded window sees only x[:, 0].
        return jnp.broadcast_to(x[:, 0:1, :], (B, l_out, C)).astype(x.dtype)

    # Lane-dense fold: (B, L, C) -> (l8, n_pad), zero-padded.  256-wide lane
    # blocks (v6e/v7x MXU width) when that adds no extra lane padding.
    n = B * C
    lane = 256 if _round_up(n, 256) == _round_up(n, 128) else 128
    n_pad = _round_up(n, lane)
    l8 = _round_up(L, 8)
    xt = jnp.transpose(x, (1, 0, 2)).reshape(L, n)
    xt = jnp.pad(xt, ((0, l8 - L), (0, n_pad - n)))

    # Output-time tiling: aim for >= 4 grid steps (pipelining, both v7x cores)
    # while capping the MXU tile at 256 rows.
    tl = min(256, _round_up(pl.cdiv(l_out, 4), 8))
    n_time = pl.cdiv(l_out, tl)
    l_out_pad = n_time * tl
    n_lane = n_pad // lane

    # Band of input rows one time-tile can touch (+7 slack so the dynamic
    # band start can be aligned down to a sublane multiple).
    band_len = _round_up((tl - 1) * stride + kernel_size + 7, 8)
    band_full = band_len >= l8
    if band_full:
        band_len = l8

    if exact:
        mode = "exact"
    elif x.dtype == jnp.bfloat16:
        mode = "bf16"
    else:
        mode = "split2"

    kernel = functools.partial(
        _moving_avg_kernel,
        kernel_size=kernel_size, stride=stride, pad=pad, l_in=L, tl=tl,
        band_len=band_len, band_full=band_full, l8=l8, mode=mode)

    # NOTE: VMEM per step = double-buffered (l8, lane) input + (tl, lane)
    # output + small (tl, band) temporaries; well under default scoped VMEM
    # for realistic DLinear shapes (raise vmem_limit_bytes only for huge L).
    out = pl.pallas_call(
        kernel,
        out_shape=jax.ShapeDtypeStruct((l_out_pad, n_pad), x.dtype),
        grid_spec=pltpu.PrefetchScalarGridSpec(
            num_scalar_prefetch=0,
            grid=(n_lane, n_time),   # time innermost: x lane-block stays resident
            in_specs=[pl.BlockSpec((l8, lane), lambda cj, ti: (0, cj))],
            out_specs=pl.BlockSpec((tl, lane), lambda cj, ti: (ti, cj)),
        ),
        compiler_params=pltpu.CompilerParams(
            dimension_semantics=("parallel", "parallel")),
    )(xt)

    out = out[:l_out, :n].reshape(l_out, B, C)
    return jnp.transpose(out, (1, 0, 2))


def moving_avg_ref(x, kernel_size, stride):
    """Pure-JAX reference mirroring the PyTorch semantics."""
    pad = (kernel_size - 1) // 2
    front = jnp.repeat(x[:, 0:1, :], pad, axis=1)
    end = jnp.repeat(x[:, -1:, :], pad, axis=1)
    xp = jnp.concatenate([front, x, end], axis=1)
    l_padded = xp.shape[1]
    l_out = (l_padded - kernel_size) // stride + 1
    windows = jnp.stack(
        [xp[:, k: k + (l_out - 1) * stride + 1: stride, :]
         for k in range(kernel_size)],
        axis=0,
    )
    return jnp.mean(windows, axis=0)


if __name__ == "__main__":
    key = jax.random.PRNGKey(0)

    # Small shapes consistent with DLinear usage: (batch, seq_len, channels).
    B, L, C = 2, 32, 7
    x = jax.random.normal(key, (B, L, C), dtype=jnp.float32)

    # 1) DLinear default (kernel_size=25, stride=1), exact f32 path:
    #    validates the banded weights / edge replication tightly.
    ref = moving_avg_ref(x, 25, 1)
    out = jax.block_until_ready(moving_avg(x, 25, 1, exact=True))
    assert out.shape == ref.shape, (out.shape, ref.shape)
    assert jnp.allclose(out, ref, atol=1e-5, rtol=1e-5), "mismatch (exact k=25)"

    # 2) Same config on the default fast path (2x bf16-split MXU passes).
    out_f = jax.block_until_ready(moving_avg(x, 25, 1))
    assert jnp.allclose(out_f, ref, atol=5e-5, rtol=5e-5), "mismatch (fast k=25)"

    # 3) Longer series: exercises the dynamic banded contraction + >1 time tile.
    x2 = jax.random.normal(jax.random.fold_in(key, 1), (2, 96, 7), jnp.float32)
    ref2 = moving_avg_ref(x2, 25, 1)
    out2 = jax.block_until_ready(moving_avg(x2, 25, 1))
    assert out2.shape == ref2.shape, (out2.shape, ref2.shape)
    assert jnp.allclose(out2, ref2, atol=5e-5, rtol=5e-5), "mismatch (L=96)"

    # 4) Even kernel size and stride > 1.
    ref3 = moving_avg_ref(x, 4, 2)
    out3 = jax.block_until_ready(moving_avg(x, 4, 2))
    assert out3.shape == ref3.shape, (out3.shape, ref3.shape)
    assert jnp.allclose(out3, ref3, atol=5e-5, rtol=5e-5), "mismatch (k=4, s=2)"

    print("KERNEL_OK")
</pallas_src>

<mosaic_0001>
module attributes {stable_mosaic.version = 11 : i64} {
  func.func @_moving_avg_kernel(%arg0: i32, %arg1: i32, %arg2: memref<32x128xf32, #tpu.memory_space<vmem>>, %arg3: memref<8x128xf32, #tpu.memory_space<vmem>>) attributes {dimension_semantics = [#tpu.dimension_semantics<parallel>, #tpu.dimension_semantics<parallel>], iteration_bounds = array<i64: 1, 4>, scalar_prefetch = 0 : i64, scratch_operands = 0 : i64, tpu.core_type = #tpu.core_type<tc>, window_params = [{transform_indices = @transform_0, window_bounds = array<i64: 32, 128>}, {transform_indices = @transform_1, window_bounds = array<i64: 8, 128>}]} {
    %c8_i32 = arith.constant 8 : i32
    %0 = arith.muli %arg1, %c8_i32 : i32
    %1 = tpu.iota {dimensions = array<i32: 0>} : vector<8x1xi32>
    %2 = vector.broadcast %0 : i32 to vector<8x1xi32>
    %3 = arith.addi %2, %1 : vector<8x1xi32>
    %c1_i32 = arith.constant 1 : i32
    %4 = vector.broadcast %c1_i32 : i32 to vector<8x1xi32>
    %5 = arith.muli %3, %4 : vector<8x1xi32>
    %c12_i32 = arith.constant 12 : i32
    %6 = vector.broadcast %c12_i32 : i32 to vector<8x1xi32>
    %7 = arith.subi %5, %6 : vector<8x1xi32>
    %c24_i32 = arith.constant 24 : i32
    %8 = vector.broadcast %c24_i32 : i32 to vector<8x1xi32>
    %9 = arith.addi %7, %8 : vector<8x1xi32>
    %c0_i32 = arith.constant 0 : i32
    %10 = vector.broadcast %c0_i32 : i32 to vector<8x1xi32>
    %11 = arith.minsi %9, %10 : vector<8x1xi32>
    %12 = arith.subi %11, %7 : vector<8x1xi32>
    %c1_i32_0 = arith.constant 1 : i32
    %13 = vector.broadcast %c1_i32_0 : i32 to vector<8x1xi32>
    %14 = arith.addi %12, %13 : vector<8x1xi32>
    %c0_i32_1 = arith.constant 0 : i32
    %15 = vector.broadcast %c0_i32_1 : i32 to vector<8x1xi32>
    %16 = arith.maxsi %14, %15 : vector<8x1xi32>
    %c31_i32 = arith.constant 31 : i32
    %17 = vector.broadcast %c31_i32 : i32 to vector<8x1xi32>
    %18 = arith.maxsi %7, %17 : vector<8x1xi32>
    %19 = arith.subi %9, %18 : vector<8x1xi32>
    %c1_i32_2 = arith.constant 1 : i32
    %20 = vector.broadcast %c1_i32_2 : i32 to vector<8x1xi32>
    %21 = arith.addi %19, %20 : vector<8x1xi32>
    %c0_i32_3 = arith.constant 0 : i32
    %22 = vector.broadcast %c0_i32_3 : i32 to vector<8x1xi32>
    %23 = arith.maxsi %21, %22 : vector<8x1xi32>
    %24 = tpu.iota {dimensions = array<i32: 1>} : vector<8x32xi32>
    %c0_i32_4 = arith.constant 0 : i32
    %25 = vector.broadcast %c0_i32_4 : i32 to vector<8x32xi32>
    %26 = arith.addi %25, %24 : vector<8x32xi32>
    %27 = vector.broadcast %7 : vector<8x1xi32> to vector<8x32xi32>
    %28 = arith.cmpi sge, %26, %27 : vector<8x32xi32>
    %29 = vector.broadcast %9 : vector<8x1xi32> to vector<8x32xi32>
    %30 = arith.cmpi sle, %26, %29 : vector<8x32xi32>
    %31 = arith.andi %28, %30 : vector<8x32xi1>
    %32 = arith.extui %31 : vector<8x32xi1> to vector<8x32xi32>
    %c0_i32_5 = arith.constant 0 : i32
    %33 = vector.broadcast %c0_i32_5 : i32 to vector<8x32xi32>
    %34 = arith.cmpi eq, %26, %33 : vector<8x32xi32>
    %c31_i32_6 = arith.constant 31 : i32
    %35 = vector.broadcast %c31_i32_6 : i32 to vector<8x32xi32>
    %36 = arith.cmpi eq, %26, %35 : vector<8x32xi32>
    %37 = vector.shape_cast %23 : vector<8x1xi32> to vector<8x1xi32>
    %38 = vector.broadcast %37 : vector<8x1xi32> to vector<8x32xi32>
    %39 = arith.select %36, %38, %32 : vector<8x32xi1>, vector<8x32xi32>
    %40 = vector.shape_cast %16 : vector<8x1xi32> to vector<8x1xi32>
    %41 = vector.broadcast %40 : vector<8x1xi32> to vector<8x32xi32>
    %42 = arith.select %34, %41, %39 : vector<8x32xi1>, vector<8x32xi32>
    %c0 = arith.constant 0 : index
    %c0_7 = arith.constant 0 : index
    %43 = vector.load %arg2[%c0, %c0_7] : memref<32x128xf32, #tpu.memory_space<vmem>>, vector<32x128xf32>
    %44 = arith.sitofp %42 : vector<8x32xi32> to vector<8x32xf32>
    %cst = arith.constant dense<0.000000e+00> : vector<8x128xf32>
    %45 = tpu.matmul %44, %43, %cst {dimension_numbers = #tpu.dot_dimension_numbers<[1], [0], [0], [1], [0, 0, 1, 1], [], []>, precision = #tpu.contract_precision<fp32>} : vector<8x32xf32>, vector<32x128xf32>, vector<8x128xf32> -> vector<8x128xf32>
    %cst_8 = arith.constant 4.000000e-02 : f32
    %46 = vector.broadcast %cst_8 : f32 to vector<8x128xf32>
    %47 = arith.mulf %45, %46 : vector<8x128xf32>
    %c0_9 = arith.constant 0 : index
    %c0_10 = arith.constant 0 : index
    %48 = vector.load %arg3[%c0_9, %c0_10] : memref<8x128xf32, #tpu.memory_space<vmem>>, vector<8x128xf32>
    tpu.vector_store %arg3[%c0_9, %c0_10], %47 {strides = array<i32>} : memref<8x128xf32, #tpu.memory_space<vmem>>, vector<8x128xf32>,
    return
  }
  func.func @transform_0(%arg0: i32, %arg1: i32) -> (i32, i32) {
    %c0_i32 = arith.constant 0 : i32
    %c0_i32_0 = arith.constant 0 : i32
    return %c0_i32, %arg0 : i32, i32
  }
  func.func @transform_1(%arg0: i32, %arg1: i32) -> (i32, i32) {
    %c0_i32 = arith.constant 0 : i32
    return %arg1, %arg0 : i32, i32
  }
}

</mosaic_0001>

<llo_original>
// kernel: tpu_custom_call.1
$region0: #{tpu_custom_call.1}
  #allocation0 [shape = 'u32[]', space=smem, size = 0x4, offset = 0x4, fixed_abs, tag = 'smem constant byte address 0x4 - core index']
  #allocation1 [shape = 'u32[144,128]{1,0:T(1,128)}', space=vmem, size = 0x12000, scoped, tag = 'internal scratch']
  %s0 = inlined_call_operand.hbm [shape: f32[32,128], index: 0, kind: input, shape index: {}]
  %s1 = inlined_call_operand.hbm [shape: f32[32,128], index: 1, kind: output, shape index: {}]
  %s2 = sld [smem:[#allocation0]]
  $region41: #{tpu_custom_call.1} parent=0
    _
  %s4 = ssub.s32 1, %s2
  %s5 = scalar_select 0, %s4, %s2
  $region1: #{tpu_custom_call.1} parent=0
    #allocation2 [shape = 'u8[16384]{0}', space=vmem, size = 0x4000, scoped, tag = 'input window, operand 0, single buffered']
    #allocation3 [shape = 's32[2]{0}', space=sflag, size = 0x8, scoped, tag = 'scoped memory for tpu_custom_call.1']
    #allocation4 [shape = 's32[2]{0}', space=sflag, size = 0x8, scoped, tag = 'scoped memory for tpu_custom_call.1']
    #allocation5 [shape = 'u8[8192]{0}', space=vmem, size = 0x2000, scoped, tag = 'output window, operand 0']
    %6 = vsyncpa [#allocation3], 0
    %7 = vsyncpa [#allocation4], 0
    %s8 = scalar_lea.sflag [#allocation4], 1
    %9 = vsyncpa %s8, 0
    loop: start=0, step=1, limit=6
    $region2: #{tpu_custom_call.1} parent=1 // loop_pre_header
      _
    $region3: #{tpu_custom_call.1} parent=1 // loop_header
      %s11 = sphi 0, %s15
      %p12 = scmp.ge.s32.totalorder %s11, 6
      %s18 = sphi 0, %s30
      %s19 = sphi 0, %s26
      %s20 = sphi 0, %s18
      %s21 = sphi 0, %s19
      %s22 = sphi 0, %s20
      %s23 = sphi 0, %s21
      %s33 = sphi 0, %s35
      %s36 = sphi 0, %s33
      %s37 = sphi 0, %s36
      %s53 = sphi 0, %s37
      %s61 = sphi 0, %s63
      %s64 = sphi 0, %s61
      %s65 = sphi 0, %s64
      %s81 = sphi 0, %s65
    $region4: #{tpu_custom_call.1} parent=1 // loop_header_branch
      %14 = sbr.rel (%p12) target = $region8
    $region5: #{tpu_custom_call.1} parent=1 // loop_body
      %s16 = ssub.s32 %s11, 1
      %s17 = ssub.s32 %s11, 2
      %s24 = sadd.s32 1, %s19
      %p25 = scmp.ge.s32.totalorder %s24, 4
      %s26 = scalar_select %p25, 0, %s24
      %s27 = sadd.s32 1, %s18
      %s28 = scalar_select %p25, %s27, %s18
      %p29 = scmp.ge.s32.totalorder %s28, 1
      %s30 = scalar_select %p29, 0, %s28
      %s31 = ssub.s32 %s18, %s30
      %p32 = scmp.eq.s32.totalorder %s31, 0
      %s34 = sadd.s32 %s33, 1
      %s35 = scalar_select %p32, %s33, %s34
      %p38 = pneg %p32
      %p39 = scmp.eq.s32.totalorder %s11, 3
      %p40 = por %p38, %p39
      %p41 = scmp.ne.s32.totalorder %s33, %s36
      %p42 = scmp.eq.s32.totalorder %s11, 0
      %p43 = por %p41, %p42
      %p44 = scmp.ne.s32.totalorder %s33, %s36
      %p45 = scmp.eq.s32.totalorder %s16, 3
      %p46 = por %p44, %p45
      %p47 = scmp.ne.s32.totalorder %s36, %s37
      %p48 = scmp.eq.s32.totalorder %s16, 0
      %p49 = por %p47, %p48
      %p50 = scmp.ne.s32.totalorder %s36, %s37
      %p51 = scmp.eq.s32.totalorder %s17, 3
      %p52 = por %p50, %p51
      %p54 = scmp.ne.s32.totalorder %s37, %s53
      %p55 = scmp.eq.s32.totalorder %s17, 0
      %p56 = por %p54, %p55
      %s57 = ssub.s32 %s19, %s26
      %s58 = ssub.s32 %s18, %s30
      %s59 = sor.u32 %s57, %s58
      %p60 = scmp.eq.s32.totalorder %s59, 0
      %s62 = sadd.s32 %s61, 1
      %s63 = scalar_select %p60, %s61, %s62
      %p66 = pneg %p60
      %p67 = scmp.eq.s32.totalorder %s11, 3
      %p68 = por %p66, %p67
      %p69 = scmp.ne.s32.totalorder %s61, %s64
      %p70 = scmp.eq.s32.totalorder %s11, 0
      %p71 = por %p69, %p70
      %p72 = scmp.ne.s32.totalorder %s61, %s64
      %p73 = scmp.eq.s32.totalorder %s16, 3
      %p74 = por %p72, %p73
      %p75 = scmp.ne.s32.totalorder %s64, %s65
      %p76 = scmp.eq.s32.totalorder %s16, 0
      %p77 = por %p75, %p76
      %p78 = scmp.ne.s32.totalorder %s64, %s65
      %p79 = scmp.eq.s32.totalorder %s17, 3
      %p80 = por %p78, %p79
      %p82 = scmp.ne.s32.totalorder %s65, %s81
      %p83 = scmp.eq.s32.totalorder %s17, 0
      %p84 = por %p82, %p83
      %p85 = scmp.le.s32.totalorder 1, %s11
      %p86 = scmp.lt.s32.totalorder %s11, 5
      %p87 = pnand %p85, %p86
      %p88 = pneg %p87
      // Predicated region
      $region9: #{tpu_custom_call.1} parent=5 // pred_check
        _
      $region10: #{tpu_custom_call.1} parent=5 // pred_check_branch
        %90 = sbr.rel (%p87) target = $region12
      $region11: #{tpu_custom_call.1} parent=5 // pred_region
        %s91 = ssub.s32 %s11, 1
        // Predicated region
        $region13: #{tpu_custom_call.1} parent=11 // pred_check
          %p92 = pneg %p49
        $region14: #{tpu_custom_call.1} parent=11 // pred_check_branch
          %94 = sbr.rel (%p92) target = $region16
        $region15: #{tpu_custom_call.1} parent=11 // pred_region
          %s96 = ssub.s32 512, 512
          %97 = vsyncadd [#allocation3], %s96
          %s98 = smul.addr %s20, 128
          %s99 = scalar_lea.hbm %s0, %s98
          %s100 = sshll.u32 [#allocation2], 4
          %s101 = int_to_ptr.vmem [resolvable:$true] %s100
          %106 = dma.hbm_to_vmem [thread:$0]  %s99, 512, %s101, [#allocation3], 128, 128, 8
        $region16: #{tpu_custom_call.1} parent=11 // pred_fallthru
          _
      $region12: #{tpu_custom_call.1} parent=5 // pred_fallthru
        _
      %p107 = scmp.lt.s32.totalorder %s11, 4
      // Predicated region
      $region17: #{tpu_custom_call.1} parent=5 // pred_check
        %p108 = pneg %p107
      $region18: #{tpu_custom_call.1} parent=5 // pred_check_branch
        %110 = sbr.rel (%p108) target = $region20
      $region19: #{tpu_custom_call.1} parent=5 // pred_region
        _
      $region20: #{tpu_custom_call.1} parent=5 // pred_fallthru
        _
      %p111 = scmp.le.s32.totalorder 1, %s11
      %p112 = scmp.lt.s32.totalorder %s11, 5
      %p113 = pnand %p111, %p112
      %p114 = pneg %p113
      // Predicated region
      $region21: #{tpu_custom_call.1} parent=5 // pred_check
        _
      $region22: #{tpu_custom_call.1} parent=5 // pred_check_branch
        %116 = sbr.rel (%p113) target = $region24
      $region23: #{tpu_custom_call.1} parent=5 // pred_region
        %s117 = ssub.s32 %s11, 1
        // Predicated region
        $region25: #{tpu_custom_call.1} parent=23 // pred_check
          %p118 = pneg %p49
        $region26: #{tpu_custom_call.1} parent=23 // pred_check_branch
          %120 = sbr.rel (%p118) target = $region28
        $region27: #{tpu_custom_call.1} parent=23 // pred_region
          %121 = dma.done [#allocation3], 512
        $region28: #{tpu_custom_call.1} parent=23 // pred_fallthru
          _
        %p122 = pneg %p49
        %p123 = pneg %p46
        %p124 = pneg %p77
        %p125 = pneg %p74
        %s126 = sand.u32 %s64, 1
        %s127 = scalar_lea.sflag [#allocation4], %s126
        %s128 = sand.u32 %s64, 1
        %s129 = smul.addr %s128, 8
        %s130 = scalar_lea.vmem [#allocation5], %s129
        %s131 = smul.u32 %s21, 8
        %v132 = vlaneseq
        %v133 = vshrl.u32 %v132, 7
        %v134 = vstv %s131
        %v135 = vadd.s32 %v134, %v133
        %v136 = vsub.s32 %v135, 12
        %v137 = vadd.s32 %v136, 24
        %vm138 = vcmp.lt.s32.totalorder %v137, 0
        %v139 = vsel %vm138, %v137, 0
        %v140 = vsub.s32 %v139, %v136
        %v141 = vadd.s32 %v140, 1
        %vm142 = vcmp.gt.s32.totalorder %v141, 0
        %v143 = vsel %vm142, %v141, 0
        %vm144 = vcmp.gt.s32.totalorder %v136, 31
        %v145 = vsel %vm144, %v136, 31
        %v146 = vsub.s32 %v137, %v145
        %v147 = vadd.s32 %v146, 1
        %vm148 = vcmp.gt.s32.totalorder %v147, 0
        %v149 = vsel %vm148, %v147, 0
        %v150 = vlaneseq
        %v151 = vand.u32 %v150, 127
        %vm152 = vcmp.ge.s32.totalorder %v151, %v136
        %vm153 = vcmp.le.s32.totalorder %v151, %v137
        %vm154 = vmand %vm152, %vm153
        %v155 = vsel %vm154, 1, 0
        %vm156 = vcmp.eq.s32.totalorder %v151, 0
        %vm157 = vcmp.eq.s32.totalorder %v151, 31
        %v158 = vsel %vm157, %v149, %v155
        %v159 = vsel %vm156, %v143, %v158
        %v160 = vld [vmem:[#allocation2] sm:$0xff]
        %v161 = vld [vmem:[#allocation2 + $0x8] sm:$0xff]
        %v162 = vld [vmem:[#allocation2 + $0x10] sm:$0xff]
        %v163 = vld [vmem:[#allocation2 + $0x18] sm:$0xff]
        %v164 = vcvt.s32.f32 %v159
        %vm165 = vcmask 261120
        %v167 = vsel %vm165, %v164, 0
        %169 = vmatprep.subr.mxu0 0.0
        %170 = vmatpush1.msra.mxu0 0.0
        %171 = vmatprep.subr.mxu0 0.0
        %172 = vmatpush1.msra.mxu0 0.0
        %173 = vmatprep.subr.mxu0 0.0
        %174 = vmatpush1.msra.mxu0 0.0
        %175 = vmatprep.subr.mxu0 0.0
        %176 = vmatpush1.msra.mxu0 0.0
        %177 = vmatprep.subr.mxu0 0.0
        %178 = vmatpush1.msra.mxu0 0.0
        %179 = vmatprep.subr.mxu0 0.0
        %180 = vmatpush1.msra.mxu0 0.0
        %181 = vmatprep.subr.mxu0 0.0
        %182 = vmatpush1.msra.mxu0 0.0
        %183 = vmatprep.subr.mxu0 0.0
        %184 = vmatpush1.msra.mxu0 0.0
        %185 = vmatprep.subr.mxu0 0.0
        %186 = vmatpush1.msra.mxu0 0.0
        %187 = vmatprep.subr.mxu0 0.0
        %188 = vmatpush1.msra.mxu0 0.0
        %189 = vmatprep.subr.mxu0 0.0
        %190 = vmatpush1.msra.mxu0 0.0
        %191 = vmatprep.subr.mxu0 0.0
        %192 = vmatpush1.msra.mxu0 0.0
        %193 = vmatprep.subr.mxu0 0.0
        %v194 = vand.u32 %v163, 4294901760
        %195 = vmatpush1.msra.mxu0 %v194
        %196 = vmatprep.subr.mxu0 0.0
        %v197 = vand.u32 %v162, 4294901760
        %198 = vmatpush1.msra.mxu0 %v197
        %199 = vmatprep.subr.mxu0 0.0
        %v200 = vand.u32 %v161, 4294901760
        %201 = vmatpush1.msra.mxu0 %v200
        %202 = vmatprep.subr.mxu0 0.0
        %v203 = vand.u32 %v160, 4294901760
        %204 = vmatpush1.msra.mxu0 %v203
        %205 = vmatprep.subr.mxu0 0.0
        %206 = vmatpush2.msra.mxu0 0.0
        %207 = vmatprep.subr.mxu0 0.0
        %208 = vmatpush2.msra.mxu0 0.0
        %209 = vmatprep.subr.mxu0 0.0
        %210 = vmatpush2.msra.mxu0 0.0
        %211 = vmatprep.subr.mxu0 0.0
        %212 = vmatpush2.msra.mxu0 0.0
        %213 = vmatprep.subr.mxu0 0.0
        %214 = vmatpush2.msra.mxu0 0.0
        %215 = vmatprep.subr.mxu0 0.0
        %216 = vmatpush2.msra.mxu0 0.0
        %217 = vmatprep.subr.mxu0 0.0
        %218 = vmatpush2.msra.mxu0 0.0
        %219 = vmatprep.subr.mxu0 0.0
        %220 = vmatpush2.msra.mxu0 0.0
        %221 = vmatprep.subr.mxu0 0.0
        %222 = vmatpush2.msra.mxu0 0.0
        %223 = vmatprep.subr.mxu0 0.0
        %224 = vmatpush2.msra.mxu0 0.0
        %225 = vmatprep.subr.mxu0 0.0
        %226 = vmatpush2.msra.mxu0 0.0
        %227 = vmatprep.subr.mxu0 0.0
        %228 = vmatpush2.msra.mxu0 0.0
        %229 = vmatprep.subr.mxu0 0.0
        %230 = vmatpush2.msra.mxu0 0.0
        %231 = vmatprep.subr.mxu0 0.0
        %232 = vmatpush2.msra.mxu0 0.0
        %233 = vmatprep.subr.mxu0 0.0
        %234 = vmatpush2.msra.mxu0 0.0
        %235 = vmatprep.subr.mxu0 0.0
        %236 = vmatpush2.msra.mxu0 0.0
        %237 = vmatprep.mubr.f32.mxu0 0.0
        %v238 = vand.u32 %v167, 4294901760
        %v239 = vsub.f32 %v167, %v238
        %v240 = vand.u32 %v239, 4294901760
        %v241 = vsub.f32 %v239, %v240
        %v242 = vand.u32 %v241, 4294901760
        %243 = vmatmul.mubr.f32.gmra.mxu0 %v242
        %v244 = vpop.f32.mrf.mxu0
        %v245 = vadd.f32 0.0, %v244
        %v246 = vpop.f32.mrf.mxu0
        %247 = vdwg.mxu0
        %248 = vmatprep.subr.mxu0 0.0
        %249 = vmatpush1.msra.mxu0 0.0
        %250 = vmatprep.subr.mxu0 0.0
        %251 = vmatpush1.msra.mxu0 0.0
        %252 = vmatprep.subr.mxu0 0.0
        %253 = vmatpush1.msra.mxu0 0.0
        %254 = vmatprep.subr.mxu0 0.0
        %255 = vmatpush1.msra.mxu0 0.0
        %256 = vmatprep.subr.mxu0 0.0
        %257 = vmatpush1.msra.mxu0 0.0
        %258 = vmatprep.subr.mxu0 0.0
        %259 = vmatpush1.msra.mxu0 0.0
        %260 = vmatprep.subr.mxu0 0.0
        %261 = vmatpush1.msra.mxu0 0.0
        %262 = vmatprep.subr.mxu0 0.0
        %263 = vmatpush1.msra.mxu0 0.0
        %264 = vmatprep.subr.mxu0 0.0
        %265 = vmatpush1.msra.mxu0 0.0
        %266 = vmatprep.subr.mxu0 0.0
        %267 = vmatpush1.msra.mxu0 0.0
        %268 = vmatprep.subr.mxu0 0.0
        %269 = vmatpush1.msra.mxu0 0.0
        %270 = vmatprep.subr.mxu0 0.0
        %271 = vmatpush1.msra.mxu0 0.0
        %272 = vmatprep.subr.mxu0 0.0
        %v273 = vand.u32 %v163, 4294901760
        %v274 = vsub.f32 %v163, %v273
        %v275 = vand.u32 %v274, 4294901760
        %v276 = vsub.f32 %v274, %v275
        %v277 = vand.u32 %v276, 4294901760
        %278 = vmatpush1.msra.mxu0 %v277
        %279 = vmatprep.subr.mxu0 0.0
        %v280 = vand.u32 %v162, 4294901760
        %v281 = vsub.f32 %v162, %v280
        %v282 = vand.u32 %v281, 4294901760
        %v283 = vsub.f32 %v281, %v282
        %v284 = vand.u32 %v283, 4294901760
        %285 = vmatpush1.msra.mxu0 %v284
        %286 = vmatprep.subr.mxu0 0.0
        %v287 = vand.u32 %v161, 4294901760
        %v288 = vsub.f32 %v161, %v287
        %v289 = vand.u32 %v288, 4294901760
        %v290 = vsub.f32 %v288, %v289
        %v291 = vand.u32 %v290, 4294901760
        %292 = vmatpush1.msra.mxu0 %v291
        %293 = vmatprep.subr.mxu0 0.0
        %v294 = vand.u32 %v160, 4294901760
        %v295 = vsub.f32 %v160, %v294
        %v296 = vand.u32 %v295, 4294901760
        %v297 = vsub.f32 %v295, %v296
        %v298 = vand.u32 %v297, 4294901760
        %299 = vmatpush1.msra.mxu0 %v298
        %300 = vmatprep.subr.mxu0 0.0
        %301 = vmatpush2.msra.mxu0 0.0
        %302 = vmatprep.subr.mxu0 0.0
        %303 = vmatpush2.msra.mxu0 0.0
        %304 = vmatprep.subr.mxu0 0.0
        %305 = vmatpush2.msra.mxu0 0.0
        %306 = vmatprep.subr.mxu0 0.0
        %307 = vmatpush2.msra.mxu0 0.0
        %308 = vmatprep.subr.mxu0 0.0
        %309 = vmatpush2.msra.mxu0 0.0
        %310 = vmatprep.subr.mxu0 0.0
        %311 = vmatpush2.msra.mxu0 0.0
        %312 = vmatprep.subr.mxu0 0.0
        %313 = vmatpush2.msra.mxu0 0.0
        %314 = vmatprep.subr.mxu0 0.0
        %315 = vmatpush2.msra.mxu0 0.0
        %316 = vmatprep.subr.mxu0 0.0
        %317 = vmatpush2.msra.mxu0 0.0
        %318 = vmatprep.subr.mxu0 0.0
        %319 = vmatpush2.msra.mxu0 0.0
        %320 = vmatprep.subr.mxu0 0.0
        %321 = vmatpush2.msra.mxu0 0.0
        %322 = vmatprep.subr.mxu0 0.0
        %323 = vmatpush2.msra.mxu0 0.0
        %324 = vmatprep.subr.mxu0 0.0
        %325 = vmatpush2.msra.mxu0 0.0
        %326 = vmatprep.subr.mxu0 0.0
        %327 = vmatpush2.msra.mxu0 0.0
        %328 = vmatprep.subr.mxu0 0.0
        %329 = vmatpush2.msra.mxu0 0.0
        %330 = vmatprep.subr.mxu0 0.0
        %331 = vmatpush2.msra.mxu0 0.0
        %332 = vmatprep.mubr.f32.mxu0 0.0
        %v333 = vand.u32 %v167, 4294901760
        %334 = vmatmul.mubr.f32.gmra.mxu0 %v333
        %v335 = vpop.f32.mrf.mxu0
        %v336 = vadd.f32 %v245, %v335
        %v337 = vpop.f32.mrf.mxu0
        %338 = vdwg.mxu0
        %339 = vmatprep.subr.mxu0 0.0
        %340 = vmatpush1.msra.mxu0 0.0
        %341 = vmatprep.subr.mxu0 0.0
        %342 = vmatpush1.msra.mxu0 0.0
        %343 = vmatprep.subr.mxu0 0.0
        %344 = vmatpush1.msra.mxu0 0.0
        %345 = vmatprep.subr.mxu0 0.0
        %346 = vmatpush1.msra.mxu0 0.0
        %347 = vmatprep.subr.mxu0 0.0
        %348 = vmatpush1.msra.mxu0 0.0
        %349 = vmatprep.subr.mxu0 0.0
        %350 = vmatpush1.msra.mxu0 0.0
        %351 = vmatprep.subr.mxu0 0.0
        %352 = vmatpush1.msra.mxu0 0.0
        %353 = vmatprep.subr.mxu0 0.0
        %354 = vmatpush1.msra.mxu0 0.0
        %355 = vmatprep.subr.mxu0 0.0
        %356 = vmatpush1.msra.mxu0 0.0
        %357 = vmatprep.subr.mxu0 0.0
        %358 = vmatpush1.msra.mxu0 0.0
        %359 = vmatprep.subr.mxu0 0.0
        %360 = vmatpush1.msra.mxu0 0.0
        %361 = vmatprep.subr.mxu0 0.0
        %362 = vmatpush1.msra.mxu0 0.0
        %363 = vmatprep.subr.mxu0 0.0
        %v364 = vand.u32 %v163, 4294901760
        %v365 = vsub.f32 %v163, %v364
        %366 = vmatpush1.msra.mxu0 %v365
        %367 = vmatprep.subr.mxu0 0.0
        %v368 = vand.u32 %v162, 4294901760
        %v369 = vsub.f32 %v162, %v368
        %370 = vmatpush1.msra.mxu0 %v369
        %371 = vmatprep.subr.mxu0 0.0
        %v372 = vand.u32 %v161, 4294901760
        %v373 = vsub.f32 %v161, %v372
        %374 = vmatpush1.msra.mxu0 %v373
        %375 = vmatprep.subr.mxu0 0.0
        %v376 = vand.u32 %v160, 4294901760
        %v377 = vsub.f32 %v160, %v376
        %378 = vmatpush1.msra.mxu0 %v377
        %379 = vmatprep.subr.mxu0 0.0
        %380 = vmatpush2.msra.mxu0 0.0
        %381 = vmatprep.subr.mxu0 0.0
        %382 = vmatpush2.msra.mxu0 0.0
        %383 = vmatprep.subr.mxu0 0.0
        %384 = vmatpush2.msra.mxu0 0.0
        %385 = vmatprep.subr.mxu0 0.0
        %386 = vmatpush2.msra.mxu0 0.0
        %387 = vmatprep.subr.mxu0 0.0
        %388 = vmatpush2.msra.mxu0 0.0
        %389 = vmatprep.subr.mxu0 0.0
        %390 = vmatpush2.msra.mxu0 0.0
        %391 = vmatprep.subr.mxu0 0.0
        %392 = vmatpush2.msra.mxu0 0.0
        %393 = vmatprep.subr.mxu0 0.0
        %394 = vmatpush2.msra.mxu0 0.0
        %395 = vmatprep.subr.mxu0 0.0
        %396 = vmatpush2.msra.mxu0 0.0
        %397 = vmatprep.subr.mxu0 0.0
        %398 = vmatpush2.msra.mxu0 0.0
        %399 = vmatprep.subr.mxu0 0.0
        %400 = vmatpush2.msra.mxu0 0.0
        %401 = vmatprep.subr.mxu0 0.0
        %402 = vmatpush2.msra.mxu0 0.0
        %403 = vmatprep.subr.mxu0 0.0
        %404 = vmatpush2.msra.mxu0 0.0
        %405 = vmatprep.subr.mxu0 0.0
        %406 = vmatpush2.msra.mxu0 0.0
        %407 = vmatprep.subr.mxu0 0.0
        %408 = vmatpush2.msra.mxu0 0.0
        %409 = vmatprep.subr.mxu0 0.0
        %410 = vmatpush2.msra.mxu0 0.0
        %411 = vmatprep.mubr.f32.mxu0 0.0
        %v412 = vand.u32 %v167, 4294901760
        %v413 = vsub.f32 %v167, %v412
        %414 = vmatmul.mubr.f32.gmra.mxu0 %v413
        %v415 = vpop.f32.mrf.mxu0
        %v416 = vadd.f32 %v336, %v415
        %v417 = vpop.f32.mrf.mxu0
        %418 = vdwg.mxu0
        %419 = vmatprep.subr.mxu0 0.0
        %420 = vmatpush1.msra.mxu0 0.0
        %421 = vmatprep.subr.mxu0 0.0
        %422 = vmatpush1.msra.mxu0 0.0
        %423 = vmatprep.subr.mxu0 0.0
        %424 = vmatpush1.msra.mxu0 0.0
        %425 = vmatprep.subr.mxu0 0.0
        %426 = vmatpush1.msra.mxu0 0.0
        %427 = vmatprep.subr.mxu0 0.0
        %428 = vmatpush1.msra.mxu0 0.0
        %429 = vmatprep.subr.mxu0 0.0
        %430 = vmatpush1.msra.mxu0 0.0
        %431 = vmatprep.subr.mxu0 0.0
        %432 = vmatpush1.msra.mxu0 0.0
        %433 = vmatprep.subr.mxu0 0.0
        %434 = vmatpush1.msra.mxu0 0.0
        %435 = vmatprep.subr.mxu0 0.0
        %436 = vmatpush1.msra.mxu0 0.0
        %437 = vmatprep.subr.mxu0 0.0
        %438 = vmatpush1.msra.mxu0 0.0
        %439 = vmatprep.subr.mxu0 0.0
        %440 = vmatpush1.msra.mxu0 0.0
        %441 = vmatprep.subr.mxu0 0.0
        %442 = vmatpush1.msra.mxu0 0.0
        %443 = vmatprep.subr.mxu0 0.0
        %v444 = vand.u32 %v163, 4294901760
        %445 = vmatpush1.msra.mxu0 %v444
        %446 = vmatprep.subr.mxu0 0.0
        %v447 = vand.u32 %v162, 4294901760
        %448 = vmatpush1.msra.mxu0 %v447
        %449 = vmatprep.subr.mxu0 0.0
        %v450 = vand.u32 %v161, 4294901760
        %451 = vmatpush1.msra.mxu0 %v450
        %452 = vmatprep.subr.mxu0 0.0
        %v453 = vand.u32 %v160, 4294901760
        %454 = vmatpush1.msra.mxu0 %v453
        %455 = vmatprep.subr.mxu0 0.0
        %456 = vmatpush2.msra.mxu0 0.0
        %457 = vmatprep.subr.mxu0 0.0
        %458 = vmatpush2.msra.mxu0 0.0
        %459 = vmatprep.subr.mxu0 0.0
        %460 = vmatpush2.msra.mxu0 0.0
        %461 = vmatprep.subr.mxu0 0.0
        %462 = vmatpush2.msra.mxu0 0.0
        %463 = vmatprep.subr.mxu0 0.0
        %464 = vmatpush2.msra.mxu0 0.0
        %465 = vmatprep.subr.mxu0 0.0
        %466 = vmatpush2.msra.mxu0 0.0
        %467 = vmatprep.subr.mxu0 0.0
        %468 = vmatpush2.msra.mxu0 0.0
        %469 = vmatprep.subr.mxu0 0.0
        %470 = vmatpush2.msra.mxu0 0.0
        %471 = vmatprep.subr.mxu0 0.0
        %472 = vmatpush2.msra.mxu0 0.0
        %473 = vmatprep.subr.mxu0 0.0
        %474 = vmatpush2.msra.mxu0 0.0
        %475 = vmatprep.subr.mxu0 0.0
        %476 = vmatpush2.msra.mxu0 0.0
        %477 = vmatprep.subr.mxu0 0.0
        %478 = vmatpush2.msra.mxu0 0.0
        %479 = vmatprep.subr.mxu0 0.0
        %480 = vmatpush2.msra.mxu0 0.0
        %481 = vmatprep.subr.mxu0 0.0
        %482 = vmatpush2.msra.mxu0 0.0
        %483 = vmatprep.subr.mxu0 0.0
        %484 = vmatpush2.msra.mxu0 0.0
        %485 = vmatprep.subr.mxu0 0.0
        %486 = vmatpush2.msra.mxu0 0.0
        %487 = vmatprep.mubr.f32.mxu0 0.0
        %v488 = vand.u32 %v167, 4294901760
        %v489 = vsub.f32 %v167, %v488
        %v490 = vand.u32 %v489, 4294901760
        %491 = vmatmul.mubr.f32.gmra.mxu0 %v490
        %v492 = vpop.f32.mrf.mxu0
        %v493 = vadd.f32 %v416, %v492
        %v494 = vpop.f32.mrf.mxu0
        %495 = vdwg.mxu0
        %496 = vmatprep.subr.mxu0 0.0
        %497 = vmatpush1.msra.mxu0 0.0
        %498 = vmatprep.subr.mxu0 0.0
        %499 = vmatpush1.msra.mxu0 0.0
        %500 = vmatprep.subr.mxu0 0.0
        %501 = vmatpush1.msra.mxu0 0.0
        %502 = vmatprep.subr.mxu0 0.0
        %503 = vmatpush1.msra.mxu0 0.0
        %504 = vmatprep.subr.mxu0 0.0
        %505 = vmatpush1.msra.mxu0 0.0
        %506 = vmatprep.subr.mxu0 0.0
        %507 = vmatpush1.msra.mxu0 0.0
        %508 = vmatprep.subr.mxu0 0.0
        %509 = vmatpush1.msra.mxu0 0.0
        %510 = vmatprep.subr.mxu0 0.0
        %511 = vmatpush1.msra.mxu0 0.0
        %512 = vmatprep.subr.mxu0 0.0
        %513 = vmatpush1.msra.mxu0 0.0
        %514 = vmatprep.subr.mxu0 0.0
        %515 = vmatpush1.msra.mxu0 0.0
        %516 = vmatprep.subr.mxu0 0.0
        %517 = vmatpush1.msra.mxu0 0.0
        %518 = vmatprep.subr.mxu0 0.0
        %519 = vmatpush1.msra.mxu0 0.0
        %520 = vmatprep.subr.mxu0 0.0
        %v521 = vand.u32 %v163, 4294901760
        %v522 = vsub.f32 %v163, %v521
        %v523 = vand.u32 %v522, 4294901760
        %524 = vmatpush1.msra.mxu0 %v523
        %525 = vmatprep.subr.mxu0 0.0
        %v526 = vand.u32 %v162, 4294901760
        %v527 = vsub.f32 %v162, %v526
        %v528 = vand.u32 %v527, 4294901760
        %529 = vmatpush1.msra.mxu0 %v528
        %530 = vmatprep.subr.mxu0 0.0
        %v531 = vand.u32 %v161, 4294901760
        %v532 = vsub.f32 %v161, %v531
        %v533 = vand.u32 %v532, 4294901760
        %534 = vmatpush1.msra.mxu0 %v533
        %535 = vmatprep.subr.mxu0 0.0
        %v536 = vand.u32 %v160, 4294901760
        %v537 = vsub.f32 %v160, %v536
        %v538 = vand.u32 %v537, 4294901760
        %539 = vmatpush1.msra.mxu0 %v538
        %540 = vmatprep.subr.mxu0 0.0
        %541 = vmatpush2.msra.mxu0 0.0
        %542 = vmatprep.subr.mxu0 0.0
        %543 = vmatpush2.msra.mxu0 0.0
        %544 = vmatprep.subr.mxu0 0.0
        %545 = vmatpush2.msra.mxu0 0.0
        %546 = vmatprep.subr.mxu0 0.0
        %547 = vmatpush2.msra.mxu0 0.0
        %548 = vmatprep.subr.mxu0 0.0
        %549 = vmatpush2.msra.mxu0 0.0
        %550 = vmatprep.subr.mxu0 0.0
        %551 = vmatpush2.msra.mxu0 0.0
        %552 = vmatprep.subr.mxu0 0.0
        %553 = vmatpush2.msra.mxu0 0.0
        %554 = vmatprep.subr.mxu0 0.0
        %555 = vmatpush2.msra.mxu0 0.0
        %556 = vmatprep.subr.mxu0 0.0
        %557 = vmatpush2.msra.mxu0 0.0
        %558 = vmatprep.subr.mxu0 0.0
        %559 = vmatpush2.msra.mxu0 0.0
        %560 = vmatprep.subr.mxu0 0.0
        %561 = vmatpush2.msra.mxu0 0.0
        %562 = vmatprep.subr.mxu0 0.0
        %563 = vmatpush2.msra.mxu0 0.0
        %564 = vmatprep.subr.mxu0 0.0
        %565 = vmatpush2.msra.mxu0 0.0
        %566 = vmatprep.subr.mxu0 0.0
        %567 = vmatpush2.msra.mxu0 0.0
        %568 = vmatprep.subr.mxu0 0.0
        %569 = vmatpush2.msra.mxu0 0.0
        %570 = vmatprep.subr.mxu0 0.0
        %571 = vmatpush2.msra.mxu0 0.0
        %572 = vmatprep.mubr.f32.mxu0 0.0
        %v573 = vand.u32 %v167, 4294901760
        %574 = vmatmul.mubr.f32.gmra.mxu0 %v573
        %v575 = vpop.f32.mrf.mxu0
        %v576 = vadd.f32 %v493, %v575
        %v577 = vpop.f32.mrf.mxu0
        %578 = vdwg.mxu0
        %579 = vmatprep.subr.mxu0 0.0
        %580 = vmatpush1.msra.mxu0 0.0
        %581 = vmatprep.subr.mxu0 0.0
        %582 = vmatpush1.msra.mxu0 0.0
        %583 = vmatprep.subr.mxu0 0.0
        %584 = vmatpush1.msra.mxu0 0.0
        %585 = vmatprep.subr.mxu0 0.0
        %586 = vmatpush1.msra.mxu0 0.0
        %587 = vmatprep.subr.mxu0 0.0
        %588 = vmatpush1.msra.mxu0 0.0
        %589 = vmatprep.subr.mxu0 0.0
        %590 = vmatpush1.msra.mxu0 0.0
        %591 = vmatprep.subr.mxu0 0.0
        %592 = vmatpush1.msra.mxu0 0.0
        %593 = vmatprep.subr.mxu0 0.0
        %594 = vmatpush1.msra.mxu0 0.0
        %595 = vmatprep.subr.mxu0 0.0
        %596 = vmatpush1.msra.mxu0 0.0
        %597 = vmatprep.subr.mxu0 0.0
        %598 = vmatpush1.msra.mxu0 0.0
        %599 = vmatprep.subr.mxu0 0.0
        %600 = vmatpush1.msra.mxu0 0.0
        %601 = vmatprep.subr.mxu0 0.0
        %602 = vmatpush1.msra.mxu0 0.0
        %603 = vmatprep.subr.mxu0 0.0
        %v604 = vand.u32 %v163, 4294901760
        %605 = vmatpush1.msra.mxu0 %v604
        %606 = vmatprep.subr.mxu0 0.0
        %v607 = vand.u32 %v162, 4294901760
        %608 = vmatpush1.msra.mxu0 %v607
        %609 = vmatprep.subr.mxu0 0.0
        %v610 = vand.u32 %v161, 4294901760
        %611 = vmatpush1.msra.mxu0 %v610
        %612 = vmatprep.subr.mxu0 0.0
        %v613 = vand.u32 %v160, 4294901760
        %614 = vmatpush1.msra.mxu0 %v613
        %615 = vmatprep.subr.mxu0 0.0
        %616 = vmatpush2.msra.mxu0 0.0
        %617 = vmatprep.subr.mxu0 0.0
        %618 = vmatpush2.msra.mxu0 0.0
        %619 = vmatprep.subr.mxu0 0.0
        %620 = vmatpush2.msra.mxu0 0.0
        %621 = vmatprep.subr.mxu0 0.0
        %622 = vmatpush2.msra.mxu0 0.0
        %623 = vmatprep.subr.mxu0 0.0
        %624 = vmatpush2.msra.mxu0 0.0
        %625 = vmatprep.subr.mxu0 0.0
        %626 = vmatpush2.msra.mxu0 0.0
        %627 = vmatprep.subr.mxu0 0.0
        %628 = vmatpush2.msra.mxu0 0.0
        %629 = vmatprep.subr.mxu0 0.0
        %630 = vmatpush2.msra.mxu0 0.0
        %631 = vmatprep.subr.mxu0 0.0
        %632 = vmatpush2.msra.mxu0 0.0
        %633 = vmatprep.subr.mxu0 0.0
        %634 = vmatpush2.msra.mxu0 0.0
        %635 = vmatprep.subr.mxu0 0.0
        %636 = vmatpush2.msra.mxu0 0.0
        %637 = vmatprep.subr.mxu0 0.0
        %638 = vmatpush2.msra.mxu0 0.0
        %639 = vmatprep.subr.mxu0 0.0
        %640 = vmatpush2.msra.mxu0 0.0
        %641 = vmatprep.subr.mxu0 0.0
        %642 = vmatpush2.msra.mxu0 0.0
        %643 = vmatprep.subr.mxu0 0.0
        %644 = vmatpush2.msra.mxu0 0.0
        %645 = vmatprep.subr.mxu0 0.0
        %646 = vmatpush2.msra.mxu0 0.0
        %647 = vmatprep.mubr.f32.mxu0 0.0
        %v648 = vand.u32 %v167, 4294901760
        %649 = vmatmul.mubr.f32.gmra.mxu0 %v648
        %v650 = vpop.f32.mrf.mxu0
        %v651 = vadd.f32 %v576, %v650
        %v652 = vpop.f32.mrf.mxu0
        %653 = vdwg.mxu0
        %v654 = vmul.f32 %v651, 0.04
        %655 = vst [vmem:[%s130] sm:$0xff] %v654
        %s656 = sand.u32 %s64, 1
        %s657 = scalar_lea.sflag [#allocation4], %s656
        %s658 = sand.u32 %s64, 1
        %s659 = smul.addr %s658, 8
        %s660 = scalar_lea.vmem [#allocation5], %s659
        // Predicated region
        $region29: #{tpu_custom_call.1} parent=23 // pred_check
          %p661 = pneg %p74
        $region30: #{tpu_custom_call.1} parent=23 // pred_check_branch
          %663 = sbr.rel (%p661) target = $region32
        $region31: #{tpu_custom_call.1} parent=23 // pred_region
          %s665 = ssub.s32 128, 128
          %666 = vsyncadd %s657, %s665
          %s667 = sadd.s32 %s20, %s21
          %s668 = smul.addr %s667, 128
          %s669 = scalar_lea.hbm %s1, %s668
          %s671 = sshll.u32 %s660, 4
          %s672 = int_to_ptr.vmem [resolvable:$true] %s671
          %674 = dma.vmem_to_hbm [thread:$0]  %s672, 128, %s669, %s657
        $region32: #{tpu_custom_call.1} parent=23 // pred_fallthru
          _
      $region24: #{tpu_custom_call.1} parent=5 // pred_fallthru
        _
      %p675 = scmp.le.s32.totalorder 2, %s11
      // Predicated region
      $region33: #{tpu_custom_call.1} parent=5 // pred_check
        %p676 = pneg %p675
      $region34: #{tpu_custom_call.1} parent=5 // pred_check_branch
        %678 = sbr.rel (%p676) target = $region36
      $region35: #{tpu_custom_call.1} parent=5 // pred_region
        %s679 = ssub.s32 %s11, 2
        // Predicated region
        $region37: #{tpu_custom_call.1} parent=35 // pred_check
          %p680 = pneg %p80
        $region38: #{tpu_custom_call.1} parent=35 // pred_check_branch
          %682 = sbr.rel (%p680) target = $region40
        $region39: #{tpu_custom_call.1} parent=35 // pred_region
          %s683 = sand.u32 %s65, 1
          %s684 = scalar_lea.sflag [#allocation4], %s683
          %s685 = sand.u32 %s65, 1
          %s686 = smul.addr %s685, 8
          %s687 = scalar_lea.vmem [#allocation5], %s686
          %688 = dma.done %s684, 128
        $region40: #{tpu_custom_call.1} parent=35 // pred_fallthru
          _
      $region36: #{tpu_custom_call.1} parent=5 // pred_fallthru
        _
    $region6: #{tpu_custom_call.1} parent=1 // loop_footer
      %s15 = sadd.s32 1, %s11
    $region7: #{tpu_custom_call.1} parent=1 // loop_footer_branch
      %10 = sbr.rel target = $region3
    $region8: #{tpu_custom_call.1} parent=1 // loop_exit
      _
    %689 = vsyncpa [#allocation3], 1
    %s690 = scalar_lea.sflag [#allocation3], 1
    %691 = vsyncpa %s690, 1
    %692 = vsyncpa [#allocation4], 1
    %s693 = scalar_lea.sflag [#allocation4], 1
    %694 = vsyncpa %s693, 1

</llo_original>
